<compile_context>
chip_gen: v5e
topology: v5e:2x2
jax: 0.10.0
libtpu: 0.0.40
codegen_flags: <defaults>
</compile_context>

<pallas_src>
import jax
import jax.numpy as jnp
from jax.experimental import pallas as pl
from jax.experimental.pallas import tpu as pltpu


def _make_bce_loss_kernel(n_rows: int, tile_n: int, n_inner: int):
    def _bce_loss_kernel(zp_ref, p_ref, out_ref, acc_ref):
        o = pl.program_id(0)      # "parallel" outer axis (megacore on v7x)
        i = pl.program_id(1)      # "arbitrary" inner reduction axis

        @pl.when(i == 0)
        def _():
            acc_ref[...] = jnp.zeros_like(acc_ref)

        # Cast to float32 (mirrors .float() in the torch module).
        zp = zp_ref[...].astype(jnp.float32)   # [tile_n, D]
        p = p_ref[...].astype(jnp.float32)     # [tile_n, D]

        # Numerically-stable softmax-weighted row dot without normalizing the
        # softmax explicitly: sum_d softmax(zp)[i,d]*p[i,d]
        #   = (sum_d e[i,d]*p[i,d]) / (sum_d e[i,d]),  e = exp(zp - rowmax)
        m = jnp.max(zp, axis=1, keepdims=True)          # [tile_n, 1]
        e = jnp.exp(zp - m)                             # EUP
        num = jnp.sum(e * p, axis=1, keepdims=True)     # [tile_n, 1]
        den = jnp.sum(e, axis=1, keepdims=True)         # [tile_n, 1]
        ratio = num / den                               # [tile_n, 1]

        # In-kernel row mask for the boundary / overflow block (replaces the
        # wrapper-side jnp.pad). Garbage rows may be NaN/inf; where() drops
        # them before they touch the accumulator.
        lb = o * n_inner + i                            # logical row-block idx
        row = lb * tile_n + jax.lax.broadcasted_iota(jnp.int32, (tile_n, 1), 0)
        ratio = jnp.where(row < n_rows, ratio, 0.0)

        acc_ref[...] += jnp.sum(ratio, keepdims=True)   # (1, 1) partial sum

        @pl.when(i == pl.num_programs(1) - 1)
        def _():
            # Lane-dense aligned store of this outer block's partial sum.
            out_ref[...] = jnp.broadcast_to(acc_ref[...], out_ref.shape)

    return _bce_loss_kernel


def _vmem_capacity_bytes() -> int:
    try:
        return int(pltpu.get_tpu_info().vmem_capacity_bytes)
    except Exception:
        return 64 * 1024 * 1024   # v7x-safe fallback


def _pick_tile_n(n: int, d: int, itemsize: int, vmem_cap: int) -> int:
    """Byte-targeted row tile: ~4 MiB per input block (amortizes the ~0.35us
    per-grid-step overhead), bounded by ~40% of physical VMEM accounting for
    2 inputs x 2 pipeline buffers (input dtype) + ~4 f32 intermediates."""
    d_pad = pl.cdiv(d, 128) * 128                    # lane-padded VMEM footprint
    target_block_bytes = 4 * 1024 * 1024
    tile = target_block_bytes // (d_pad * itemsize)

    per_row_bytes = 4 * d_pad * itemsize + 4 * d_pad * 4
    tile = min(tile, int(0.40 * vmem_cap) // per_row_bytes)

    if tile >= n:
        return n                  # single block == full array (no tiling constraint)
    return max(8, (tile // 8) * 8)


def my_bce_loss(zp_pro_0, p0, *, tile_n=None):
    """Pallas TPU implementation of My_BCE_loss.forward.

    zp_pro_0: [N, D]   p0: [N, D]   returns: scalar float32
    """
    N, D = zp_pro_0.shape
    assert p0.shape == (N, D), "zp_pro_0 and p0 must have matching [N, D] shapes"

    itemsize = max(jnp.dtype(zp_pro_0.dtype).itemsize,
                   jnp.dtype(p0.dtype).itemsize)
    vmem_cap = _vmem_capacity_bytes()

    if tile_n is None:
        tile_n = _pick_tile_n(N, D, itemsize, vmem_cap)
    elif tile_n >= N:
        tile_n = N
    else:
        tile_n = max(8, (tile_n // 8) * 8)

    n_blocks = pl.cdiv(N, tile_n)
    n_outer = 2 if n_blocks >= 2 else 1    # v7x has 2 TCs; harmless on v5e/v6e
    n_inner = pl.cdiv(n_blocks, n_outer)

    # Scoped VMEM limit: unlock the larger tiles while leaving headroom under
    # the physical capacity (64 MiB on v7x, 128 MiB on v5e/v6e).
    vmem_limit = min(int(0.70 * vmem_cap), 100 * 1024 * 1024)

    def in_map(o, i):
        # Clamp so an overflow logical block (only possible when n_blocks is
        # not a multiple of n_outer) still indexes in-bounds; its rows are
        # fully masked inside the kernel via the logical block index.
        return (jnp.minimum(o * n_inner + i, n_blocks - 1), 0)

    cost = pl.CostEstimate(
        flops=4 * N * D,
        transcendentals=N * D,
        bytes_accessed=2 * N * D * itemsize + n_outer * 8 * 128 * 4,
    )

    partials = pl.pallas_call(
        _make_bce_loss_kernel(N, tile_n, n_inner),
        out_shape=jax.ShapeDtypeStruct((n_outer, 8, 128), jnp.float32),
        grid_spec=pltpu.PrefetchScalarGridSpec(
            num_scalar_prefetch=0,
            grid=(n_outer, n_inner),
            in_specs=[
                pl.BlockSpec((tile_n, D), in_map),
                pl.BlockSpec((tile_n, D), in_map),
            ],
            out_specs=pl.BlockSpec((1, 8, 128), lambda o, i: (o, 0, 0)),
            scratch_shapes=[pltpu.VMEM((1, 1), jnp.float32)],
        ),
        compiler_params=pltpu.CompilerParams(
            dimension_semantics=("parallel", "arbitrary"),
            vmem_limit_bytes=vmem_limit,
        ),
        cost_estimate=cost,
    )(zp_pro_0, p0)

    # Tiny epilogue in XLA: combine per-core partials, divide by the true N.
    return jnp.sum(partials[:, 0, 0]) / jnp.float32(N)


def _reference(zp_pro_0, p0):
    zp = zp_pro_0.astype(jnp.float32)
    p = p0.astype(jnp.float32)
    sm = jax.nn.softmax(zp, axis=1)
    res = jnp.matmul(sm, p.T)
    return jnp.mean(jnp.diagonal(res))


if __name__ == "__main__":
    key = jax.random.PRNGKey(0)
    k1, k2, k3, k4, k5, k6, k7, k8 = jax.random.split(key, 8)

    # A) Small shape consistent with the module (rows = samples, softmax dim=1).
    N, D = 8, 32
    zp = jax.random.normal(k1, (N, D), dtype=jnp.float32)
    p = jax.random.normal(k2, (N, D), dtype=jnp.float32)
    out = jax.block_until_ready(my_bce_loss(zp, p))
    ref = _reference(zp, p)
    assert jnp.allclose(out, ref, atol=1e-5, rtol=1e-5), (out, ref)

    # B) bf16 inputs, N not 8-aligned (single full-array block path).
    zp_b = jax.random.normal(k3, (50, 128), dtype=jnp.bfloat16)
    p_b = jax.random.normal(k4, (50, 128), dtype=jnp.bfloat16)
    out_b = jax.block_until_ready(my_bce_loss(zp_b, p_b))
    ref_b = _reference(zp_b, p_b)
    assert jnp.allclose(out_b, ref_b, atol=1e-2, rtol=1e-2), (out_b, ref_b)

    # C) Multi-step grid (forced small tile): 8 row blocks -> (2 outer, 4 inner),
    #    boundary block rows 1000..1023 masked in-kernel.
    zp_c = jax.random.normal(k5, (1000, 64), dtype=jnp.float32)
    p_c = jax.random.normal(k6, (1000, 64), dtype=jnp.float32)
    out_c = jax.block_until_ready(my_bce_loss(zp_c, p_c, tile_n=128))
    ref_c = _reference(zp_c, p_c)
    assert jnp.allclose(out_c, ref_c, atol=1e-5, rtol=1e-4), (out_c, ref_c)

    # D) Odd number of row blocks (5) with 2 outer partials -> exercises the
    #    clamped overflow block whose rows are fully masked.
    zp_d = jax.random.normal(k7, (600, 64), dtype=jnp.float32)
    p_d = jax.random.normal(k8, (600, 64), dtype=jnp.float32)
    out_d = jax.block_until_ready(my_bce_loss(zp_d, p_d, tile_n=128))
    ref_d = _reference(zp_d, p_d)
    assert jnp.allclose(out_d, ref_d, atol=1e-5, rtol=1e-4), (out_d, ref_d)

    print("KERNEL_OK")
</pallas_src>

<mosaic_0001>
module attributes {stable_mosaic.version = 11 : i64} {
  func.func @_bce_loss_kernel(%arg0: i32, %arg1: i32, %arg2: memref<8x32xf32, #tpu.memory_space<vmem>>, %arg3: memref<8x32xf32, #tpu.memory_space<vmem>>, %arg4: memref<1x8x128xf32, #tpu.memory_space<vmem>>, %arg5: memref<1x1xf32, #tpu.memory_space<vmem>>) attributes {dimension_semantics = [#tpu.dimension_semantics<parallel>, #tpu.dimension_semantics<arbitrary>], iteration_bounds = array<i64: 1, 1>, scalar_prefetch = 0 : i64, scratch_operands = 1 : i64, tpu.core_type = #tpu.core_type<tc>, window_params = [{transform_indices = @transform_0, window_bounds = array<i64: 8, 32>}, {transform_indices = @transform_1, window_bounds = array<i64: 8, 32>}, {transform_indices = @transform_2, window_bounds = array<i64: 1, 8, 128>}]} {
    %c0_i32 = arith.constant 0 : i32
    %0 = arith.cmpi eq, %arg1, %c0_i32 : i32
    %1 = arith.extui %0 : i1 to i32
    %c0_i32_0 = arith.constant 0 : i32
    %2 = arith.cmpi ne, %1, %c0_i32_0 : i32
    scf.if %2 {
      %cst_15 = arith.constant 0.000000e+00 : f32
      %37 = vector.broadcast %cst_15 : f32 to vector<1x1xf32>
      %c0_16 = arith.constant 0 : index
      %c0_17 = arith.constant 0 : index
      %38 = vector.load %arg5[%c0_16, %c0_17] : memref<1x1xf32, #tpu.memory_space<vmem>>, vector<1x1xf32>
      tpu.vector_store %arg5[%c0_16, %c0_17], %37 {strides = array<i32>} : memref<1x1xf32, #tpu.memory_space<vmem>>, vector<1x1xf32>,
    } else {
    }
    %c0 = arith.constant 0 : index
    %c0_1 = arith.constant 0 : index
    %3 = vector.load %arg2[%c0, %c0_1] : memref<8x32xf32, #tpu.memory_space<vmem>>, vector<8x32xf32>
    %c0_2 = arith.constant 0 : index
    %c0_3 = arith.constant 0 : index
    %4 = vector.load %arg3[%c0_2, %c0_3] : memref<8x32xf32, #tpu.memory_space<vmem>>, vector<8x32xf32>
    %cst = arith.constant dense<0xFF800000> : vector<8xf32>
    %5 = vector.multi_reduction <maximumf>, %3, %cst [1] : vector<8x32xf32> to vector<8xf32>
    %6 = vector.shape_cast %5 : vector<8xf32> to vector<8x1xf32>
    %7 = vector.broadcast %6 : vector<8x1xf32> to vector<8x32xf32>
    %8 = arith.subf %3, %7 : vector<8x32xf32>
    %9 = math.exp %8 : vector<8x32xf32>
    %10 = arith.mulf %9, %4 : vector<8x32xf32>
    %cst_4 = arith.constant dense<0.000000e+00> : vector<8xf32>
    %11 = vector.multi_reduction <add>, %10, %cst_4 [1] : vector<8x32xf32> to vector<8xf32>
    %12 = vector.shape_cast %11 : vector<8xf32> to vector<8x1xf32>
    %cst_5 = arith.constant dense<0.000000e+00> : vector<8xf32>
    %13 = vector.multi_reduction <add>, %9, %cst_5 [1] : vector<8x32xf32> to vector<8xf32>
    %14 = vector.shape_cast %13 : vector<8xf32> to vector<8x1xf32>
    %15 = arith.divf %12, %14 : vector<8x1xf32>
    %c1_i32 = arith.constant 1 : i32
    %16 = arith.muli %arg0, %c1_i32 : i32
    %17 = arith.addi %16, %arg1 : i32
    %c8_i32 = arith.constant 8 : i32
    %18 = arith.muli %17, %c8_i32 : i32
    %19 = tpu.iota {dimensions = array<i32: 0>} : vector<8x1xi32>
    %20 = vector.broadcast %18 : i32 to vector<8x1xi32>
    %21 = arith.addi %20, %19 : vector<8x1xi32>
    %c8_i32_6 = arith.constant 8 : i32
    %22 = vector.broadcast %c8_i32_6 : i32 to vector<8x1xi32>
    %23 = arith.cmpi slt, %21, %22 : vector<8x1xi32>
    %cst_7 = arith.constant 0.000000e+00 : f32
    %24 = vector.broadcast %cst_7 : f32 to vector<8x1xf32>
    %25 = arith.select %23, %15, %24 : vector<8x1xi1>, vector<8x1xf32>
    %c0_8 = arith.constant 0 : index
    %c0_9 = arith.constant 0 : index
    %26 = vector.load %arg5[%c0_8, %c0_9] : memref<1x1xf32, #tpu.memory_space<vmem>>, vector<1x1xf32>
    %27 = vector.shape_cast %25 : vector<8x1xf32> to vector<1x8x1xf32>
    %cst_10 = arith.constant dense<0.000000e+00> : vector<1xf32>
    %28 = vector.multi_reduction <add>, %27, %cst_10 [1, 2] : vector<1x8x1xf32> to vector<1xf32>
    %29 = vector.shape_cast %28 : vector<1xf32> to vector<1x1x1xf32>
    %30 = vector.extract %29[0, 0, 0] : f32 from vector<1x1x1xf32>
    %31 = vector.broadcast %30 : f32 to vector<1x1xf32>
    %32 = arith.addf %26, %31 : vector<1x1xf32>
    %c0_11 = arith.constant 0 : index
    %c0_12 = arith.constant 0 : index
    %33 = vector.load %arg5[%c0_11, %c0_12] : memref<1x1xf32, #tpu.memory_space<vmem>>, vector<1x1xf32>
    tpu.vector_store %arg5[%c0_11, %c0_12], %32 {strides = array<i32>} : memref<1x1xf32, #tpu.memory_space<vmem>>, vector<1x1xf32>,
    %c0_i32_13 = arith.constant 0 : i32
    %34 = arith.cmpi eq, %arg1, %c0_i32_13 : i32
    %35 = arith.extui %34 : i1 to i32
    %c0_i32_14 = arith.constant 0 : i32
    %36 = arith.cmpi ne, %35, %c0_i32_14 : i32
    scf.if %36 {
      %c0_15 = arith.constant 0 : index
      %c0_16 = arith.constant 0 : index
      %37 = vector.load %arg5[%c0_15, %c0_16] : memref<1x1xf32, #tpu.memory_space<vmem>>, vector<1x1xf32>
      %38 = vector.shape_cast %37 : vector<1x1xf32> to vector<1x1x1xf32>
      %39 = vector.broadcast %38 : vector<1x1x1xf32> to vector<1x8x128xf32>
      %c0_17 = arith.constant 0 : index
      %c0_18 = arith.constant 0 : index
      %c0_19 = arith.constant 0 : index
      %40 = vector.load %arg4[%c0_17, %c0_18, %c0_19] : memref<1x8x128xf32, #tpu.memory_space<vmem>>, vector<1x8x128xf32>
      tpu.vector_store %arg4[%c0_17, %c0_18, %c0_19], %39 {strides = array<i32>} : memref<1x8x128xf32, #tpu.memory_space<vmem>>, vector<1x8x128xf32>,
    } else {
    }
    return
  }
  func.func @transform_0(%arg0: i32, %arg1: i32) -> (i32, i32) {
    %c1_i32 = arith.constant 1 : i32
    %0 = arith.muli %arg0, %c1_i32 : i32
    %1 = arith.addi %0, %arg1 : i32
    %c0_i32 = arith.constant 0 : i32
    %2 = arith.minsi %1, %c0_i32 : i32
    %c0_i32_0 = arith.constant 0 : i32
    %c0_i32_1 = arith.constant 0 : i32
    return %2, %c0_i32_0 : i32, i32
  }
  func.func @transform_1(%arg0: i32, %arg1: i32) -> (i32, i32) {
    %c1_i32 = arith.constant 1 : i32
    %0 = arith.muli %arg0, %c1_i32 : i32
    %1 = arith.addi %0, %arg1 : i32
    %c0_i32 = arith.constant 0 : i32
    %2 = arith.minsi %1, %c0_i32 : i32
    %c0_i32_0 = arith.constant 0 : i32
    %c0_i32_1 = arith.constant 0 : i32
    return %2, %c0_i32_0 : i32, i32
  }
  func.func @transform_2(%arg0: i32, %arg1: i32) -> (i32, i32, i32) {
    %c0_i32 = arith.constant 0 : i32
    %c0_i32_0 = arith.constant 0 : i32
    %c0_i32_1 = arith.constant 0 : i32
    return %arg0, %c0_i32, %c0_i32_0 : i32, i32, i32
  }
}

</mosaic_0001>

<llo_original>
// kernel: tpu_custom_call.1
$region0: #{tpu_custom_call.1}
  #allocation0 [shape = 'u32[]', space=smem, size = 0x4, offset = 0x4, fixed_abs, tag = 'smem constant byte address 0x4 - core index']
  #allocation1 [shape = 'u32[72,128]{1,0:T(1,128)}', space=vmem, size = 0x9000, scoped, tag = 'internal scratch']
  #allocation2 [shape = 'f32[1,1]{1,0:T(1,128)}', space=vmem, size = 0x200, scoped, tag = 'scratch operand']
  %s0 = inlined_call_operand.hbm [shape: f32[8,32], index: 0, kind: input, shape index: {}]
  %s1 = inlined_call_operand.hbm [shape: f32[8,32], index: 1, kind: input, shape index: {}]
  %s2 = inlined_call_operand.hbm [shape: f32[1,8,128], index: 2, kind: output, shape index: {}]
  %s3 = sld [smem:[#allocation0]]
  $region34: #{tpu_custom_call.1} parent=0
    _
  %s5 = ssub.s32 1, %s3
  %s6 = scalar_select 0, %s5, %s3
  $region1: #{tpu_custom_call.1} parent=0
    #allocation3 [shape = 'u8[4096]{0}', space=vmem, size = 0x1000, scoped, tag = 'input window, operand 0, single buffered']
    #allocation4 [shape = 's32[1]{0}', space=sflag, size = 0x4, scoped, tag = 'scoped memory for tpu_custom_call.1']
    #allocation5 [shape = 's32[1]{0}', space=sflag, size = 0x4, scoped, tag = 'scoped memory for tpu_custom_call.1']
    #allocation6 [shape = 'u8[4096]{0}', space=vmem, size = 0x1000, scoped, tag = 'input window, operand 1, single buffered']
    #allocation7 [shape = 's32[1]{0}', space=sflag, size = 0x4, scoped, tag = 'scoped memory for tpu_custom_call.1']
    #allocation8 [shape = 'u8[4096]{0}', space=vmem, size = 0x1000, scoped, tag = 'output window, operand 0, single buffered']
    %7 = vsyncpa [#allocation4], 0
    %8 = vsyncpa [#allocation7], 0
    %9 = vsyncpa [#allocation5], 0
    // Predicated region
    $region2: #{tpu_custom_call.1} parent=1 // pred_check
      _
    $region3: #{tpu_custom_call.1} parent=1 // pred_check_branch
      %11 = sbr.rel (0) target = $region5
    $region4: #{tpu_custom_call.1} parent=1 // pred_region
      %s12 = sadd.s32 0, 0
      %p13 = scmp.lt.s32.totalorder %s12, 0
      %s14 = scalar_select %p13, %s12, 0
      %16 = vsyncadd [#allocation4], 0
      %s17 = smul.addr %s14, 8
      %s18 = scalar_lea.hbm %s0, %s17
      %s20 = sshll.u32 %s18, 4
      %s21 = int_to_ptr.hbm [resolvable:$true] %s20
      %s22 = sshll.u32 [#allocation3], 4
      %s23 = int_to_ptr.vmem [resolvable:$true] %s22
      %25 = dma.hbm_to_vmem [thread:$0]  %s21, 128, %s23, [#allocation4]
    $region5: #{tpu_custom_call.1} parent=1 // pred_fallthru
      _
    // Predicated region
    $region6: #{tpu_custom_call.1} parent=1 // pred_check
      _
    $region7: #{tpu_custom_call.1} parent=1 // pred_check_branch
      %27 = sbr.rel (0) target = $region9
    $region8: #{tpu_custom_call.1} parent=1 // pred_region
      %s28 = sadd.s32 0, 0
      %p29 = scmp.lt.s32.totalorder %s28, 0
      %s30 = scalar_select %p29, %s28, 0
      %32 = vsyncadd [#allocation7], 0
      %s33 = smul.addr %s30, 8
      %s34 = scalar_lea.hbm %s1, %s33
      %s36 = sshll.u32 %s34, 4
      %s37 = int_to_ptr.hbm [resolvable:$true] %s36
      %s38 = sshll.u32 [#allocation6], 4
      %s39 = int_to_ptr.vmem [resolvable:$true] %s38
      %41 = dma.hbm_to_vmem [thread:$0]  %s37, 128, %s39, [#allocation7]
    $region9: #{tpu_custom_call.1} parent=1 // pred_fallthru
      _
    // Predicated region
    $region10: #{tpu_custom_call.1} parent=1 // pred_check
      _
    $region11: #{tpu_custom_call.1} parent=1 // pred_check_branch
      %43 = sbr.rel (0) target = $region13
    $region12: #{tpu_custom_call.1} parent=1 // pred_region
      %45 = dma.done [#allocation4], 128
    $region13: #{tpu_custom_call.1} parent=1 // pred_fallthru
      _
    // Predicated region
    $region14: #{tpu_custom_call.1} parent=1 // pred_check
      _
    $region15: #{tpu_custom_call.1} parent=1 // pred_check_branch
      %47 = sbr.rel (0) target = $region17
    $region16: #{tpu_custom_call.1} parent=1 // pred_region
      %49 = dma.done [#allocation7], 128
    $region17: #{tpu_custom_call.1} parent=1 // pred_fallthru
      _
    %s50 = sadd.s32 0, 0
    %p51 = scmp.lt.s32.totalorder %s50, 0
    %s52 = scalar_select %p51, %s50, 0
    %s53 = sadd.s32 0, 0
    %p54 = scmp.lt.s32.totalorder %s53, 0
    %s55 = scalar_select %p54, %s53, 0
    %p56 = scmp.eq.s32.totalorder 0, 0
    // Predicated region
    $region18: #{tpu_custom_call.1} parent=1 // pred_check
      %p57 = pneg %p56
    $region19: #{tpu_custom_call.1} parent=1 // pred_check_branch
      %59 = sbr.rel (%p57) target = $region21
    $region20: #{tpu_custom_call.1} parent=1 // pred_region
      %vm60 = vcmask 0
      %61 = vst.msk [vmem:[#allocation2] sm:$0x1] %vm60, 0.0
    $region21: #{tpu_custom_call.1} parent=1 // pred_fallthru
      _
    %v62 = vld [vmem:[#allocation3] sm:$0xff]
    %v63 = vld [vmem:[#allocation6] sm:$0xff]
    %vm64 = vcmask 261120
    %v65 = vsel %vm64, %v62, -inf
    %66 = vmax.xlane.f32.xlu0 %v65
    %v67 = vpop.xlane.xlu0 %66
    %v68 = vsub.f32 %v62, %v67
    %v69 = vmul.f32 %v68, 1.442695
    %v70 = vpow.pop %v69
    %v71 = vmul.f32 %v70, %v63
    %v72 = vsel %vm64, %v71, 0.0
    %73 = vadd.xlane.f32.xlu0 %v72
    %v74 = vpop.xlane.xlu0 %73
    %v75 = vsel %vm64, %v70, 0.0
    %76 = vadd.xlane.f32.xlu0 %v75
    %v77 = vpop.xlane.xlu0 %76
    %v78 = vrcp.pop %v77
    %v79 = vmul.f32 %v77, %v78
    %v80 = vsub.f32 1.0, %v79
    %v81 = vmul.f32 %v78, %v80
    %v82 = vadd.f32 %v78, %v81
    %vm83 = vweird.f32 %v77
    %vm84 = vweird.f32 %v78
    %vm85 = vmor %vm83, %vm84
    %v86 = vsel %vm85, %v78, %v82
    %v87 = vand.u32 2147483647, %v77
    %vm88 = vcmp.eq.f32.partialorder %v87, 8.507059e+37
    %v89 = vand.u32 %v77, 2147483648
    %v90 = vor.u32 1.1754944e-38, %v89
    %v91 = vsel %vm88, %v90, %v86
    %v92 = vmul.f32 %v74, %v91
    %s93 = sadd.s32 0, 0
    %s94 = smul.u32 %s93, 8
    %v95 = vlaneseq
    %v96 = vshrl.u32 %v95, 7
    %v97 = vstv %s94
    %v98 = vadd.s32 %v97, %v96
    %vm99 = vcmp.lt.s32.totalorder %v98, 8
    %v100 = vsel %vm99, %v92, 0.0
    %v101 = vld [vmem:[#allocation2] sm:$0x1]
    %vm102 = vcmask 7168
    %v103 = vsel %vm102, %v100, 0.0
    %104 = vadd.xlane.f32.xlu0 %v103
    %v105 = vpop.xlane.xlu0 %104
    %v106 = vrot.slane %v105, 4
    %v107 = vadd.f32 %v105, %v106
    %v108 = vrot.slane %v107, 2
    %v109 = vadd.f32 %v107, %v108
    %v110 = vrot.slane %v109, 1
    %v111 = vadd.f32 %v109, %v110
    %s112 = vtos %v111
    %v113 = vstv %s112
    %v114 = vadd.f32 %v101, %v113
    %vm115 = vcmask 0
    %116 = vst.msk [vmem:[#allocation2] sm:$0x1] %vm115, %v114
    // Predicated region
    $region22: #{tpu_custom_call.1} parent=1 // pred_check
      %p117 = pneg %p56
    $region23: #{tpu_custom_call.1} parent=1 // pred_check_branch
      %119 = sbr.rel (%p117) target = $region25
    $region24: #{tpu_custom_call.1} parent=1 // pred_region
      %v120 = vld [vmem:[#allocation2] sm:$0x1]
      %v122 = vperm.slane %v120, 0
      %123 = vset.pattern.permute.xlu0 0
      %124 = vperm.xlu0 %123, %v122
      %v125 = vpop.permute.xlu0 %124
      %127 = vst [vmem:[#allocation8] sm:$0xff] %v125
    $region25: #{tpu_custom_call.1} parent=1 // pred_fallthru
      _
    // Predicated region
    $region26: #{tpu_custom_call.1} parent=1 // pred_check
      _
    $region27: #{tpu_custom_call.1} parent=1 // pred_check_branch
      %129 = sbr.rel (0) target = $region29
    $region28: #{tpu_custom_call.1} parent=1 // pred_region
      %131 = vsyncadd [#allocation5], 0
      %s133 = sshll.u32 [#allocation8], 4
      %s134 = int_to_ptr.vmem [resolvable:$true] %s133
      %s135 = sshll.u32 %s2, 4
      %s136 = int_to_ptr.hbm [resolvable:$true] %s135
      %138 = dma.vmem_to_hbm [thread:$0]  %s134, 128, %s136, [#allocation5]
    $region29: #{tpu_custom_call.1} parent=1 // pred_fallthru
      _
    // Predicated region
    $region30: #{tpu_custom_call.1} parent=1 // pred_check
      _
    $region31: #{tpu_custom_call.1} parent=1 // pred_check_branch
      %140 = sbr.rel (0) target = $region33
    $region32: #{tpu_custom_call.1} parent=1 // pred_region
      %142 = dma.done [#allocation5], 128
    $region33: #{tpu_custom_call.1} parent=1 // pred_fallthru
      _
    %143 = vsyncpa [#allocation4], 1
    %144 = vsyncpa [#allocation7], 1
    %145 = vsyncpa [#allocation5], 1

</llo_original>
